<compile_context>
chip_gen: v5e
topology: v5e:2x2
jax: 0.10.0
libtpu: 0.0.40
codegen_flags: <defaults>
</compile_context>

<pallas_src>
import jax
import jax.numpy as jnp
from jax.experimental import pallas as pl
from jax.experimental.pallas import tpu as pltpu

H1, H2 = 256, 128


def _discriminator_kernel(xt_ref, w1_ref, b1_ref, w2_ref, b2_ref, w3_ref, b3_ref, o_ref):
    xt = xt_ref[...]                                           # (D, tb), batch on lanes

    # Layer 1: (H1, D) @ (D, tb) + b1 column  -> ReLU.   M=H1 rows, N=tb lanes.
    h1 = jnp.dot(w1_ref[...], xt, preferred_element_type=jnp.float32) + b1_ref[...]
    h1 = jnp.maximum(h1, 0.0)

    # Layer 2: (H2, H1) @ (H1, tb) + b2 column -> ReLU.
    h2 = jnp.dot(w2_ref[...], h1, preferred_element_type=jnp.float32) + b2_ref[...]
    h2 = jnp.maximum(h2, 0.0)

    # Layer 3: (128 -> 1) as VPU multiply + sublane reduction (no M=1 MXU matmul).
    # Result is a lane-dense (1, tb) row.
    z = jnp.sum(h2 * w3_ref[...], axis=0, keepdims=True) + b3_ref[0]
    o_ref[...] = jax.nn.sigmoid(z).astype(o_ref.dtype)


def discriminator_forward(x, params, *, tb=512, compute_dtype=jnp.float32):
    """Fused MLP discriminator forward.

    x:      (B, input_dim) float32
    params: dict with (PyTorch nn.Linear layout / column biases)
              w1 (H1, D),  b1 (H1, 1)
              w2 (H2, H1), b2 (H2, 1)
              w3 (H2, 1),  b3 (1,)
    Returns (B, 1) float32 probabilities.
    """
    B, D = x.shape
    w1, b1 = params["w1"], params["b1"]
    w2, b2 = params["w2"], params["b2"]
    w3, b3 = params["w3"], params["b3"]

    # Pick the batch tile: whole batch if it fits one tile, else tb (multiple of 128)
    # with zero-padding so arbitrary batch sizes work.
    if B <= tb:
        tb_eff, Bp = B, B
    else:
        assert tb % 128 == 0, "tb must be a multiple of 128 when tiling the batch"
        tb_eff = tb
        Bp = ((B + tb - 1) // tb) * tb

    # Batch on the lane axis.
    x_t = x.T                                                  # (D, B)
    if Bp != B:
        x_t = jnp.pad(x_t, ((0, 0), (0, Bp - B)))

    # Optional bf16 weights/activations for v6e/v7x (accumulation stays f32).
    x_t = x_t.astype(compute_dtype)
    w1c = w1.astype(compute_dtype)
    w2c = w2.astype(compute_dtype)
    w3c = w3.astype(compute_dtype)

    grid = (Bp // tb_eff,)
    out_t = pl.pallas_call(
        _discriminator_kernel,
        out_shape=jax.ShapeDtypeStruct((1, Bp), jnp.float32),
        grid_spec=pltpu.PrefetchScalarGridSpec(
            num_scalar_prefetch=0,
            grid=grid,
            in_specs=[
                pl.BlockSpec((D, tb_eff), lambda i: (0, i)),        # x^T tile (lanes = batch)
                pl.BlockSpec((H1, D), lambda i: (0, 0)),            # W1, resident
                pl.BlockSpec((H1, 1), lambda i: (0, 0)),            # b1 column, resident
                pl.BlockSpec((H2, H1), lambda i: (0, 0)),           # W2, resident
                pl.BlockSpec((H2, 1), lambda i: (0, 0)),            # b2 column, resident
                pl.BlockSpec((H2, 1), lambda i: (0, 0)),            # w3 column, resident
                pl.BlockSpec(memory_space=pltpu.MemorySpace.SMEM),  # b3 scalar in SMEM
            ],
            out_specs=pl.BlockSpec((1, tb_eff), lambda i: (0, i)),  # lane-dense output row
        ),
        compiler_params=pltpu.CompilerParams(
            dimension_semantics=("parallel",),                       # megacore split on v7x
        ),
    )(x_t, w1c, b1, w2c, b2, w3c, b3)

    return out_t[0, :B].reshape(B, 1)


def init_params(key, input_dim):
    """Deterministic init (uniform, like PyTorch's default scale), in kernel layout."""
    ks = jax.random.split(key, 6)

    def lin(kw, kb, fan_in, fan_out):
        bound = 1.0 / jnp.sqrt(fan_in)
        w = jax.random.uniform(kw, (fan_out, fan_in), jnp.float32, -bound, bound)
        b = jax.random.uniform(kb, (fan_out, 1), jnp.float32, -bound, bound)
        return w, b

    w1, b1 = lin(ks[0], ks[1], input_dim, H1)
    w2, b2 = lin(ks[2], ks[3], H1, H2)
    w3, b3 = lin(ks[4], ks[5], H2, 1)          # w3: (1, H2), b3: (1, 1)
    return {
        "w1": w1, "b1": b1,
        "w2": w2, "b2": b2,
        "w3": w3.reshape(H2, 1),               # store as column for the kernel
        "b3": b3.reshape(1,),                  # scalar (SMEM)
    }


def reference_forward(x, p):
    h1 = jnp.maximum(x @ p["w1"].T + p["b1"].T, 0.0)
    h2 = jnp.maximum(h1 @ p["w2"].T + p["b2"].T, 0.0)
    z = h2 @ p["w3"] + p["b3"]
    return jax.nn.sigmoid(z)


if __name__ == "__main__":
    key = jax.random.PRNGKey(0)
    k_x, k_x2, k_p = jax.random.split(key, 3)

    input_dim = 32
    params = init_params(k_p, input_dim)

    # Small case: whole batch in a single lane-dense tile (grid = 1).
    x = jax.random.normal(k_x, (8, input_dim), jnp.float32)
    out = jax.block_until_ready(discriminator_forward(x, params))
    ref = reference_forward(x, params)
    assert out.shape == (8, 1)
    assert jnp.allclose(out, ref, atol=1e-5, rtol=1e-5), "mismatch vs reference (small batch)"

    # Non-multiple batch: exercises zero-padding + a multi-step grid (megacore on v7x).
    x2 = jax.random.normal(k_x2, (272, input_dim), jnp.float32)
    out2 = jax.block_until_ready(discriminator_forward(x2, params, tb=128))
    ref2 = reference_forward(x2, params)
    assert out2.shape == (272, 1)
    assert jnp.allclose(out2, ref2, atol=1e-5, rtol=1e-5), "mismatch vs reference (tiled batch)"

    print("KERNEL_OK")
</pallas_src>

<mosaic_0001>
module attributes {stable_mosaic.version = 11 : i64} {
  func.func @_discriminator_kernel(%arg0: i32, %arg1: memref<32x8xf32, #tpu.memory_space<vmem>>, %arg2: memref<256x32xf32, #tpu.memory_space<vmem>>, %arg3: memref<256x1xf32, #tpu.memory_space<vmem>>, %arg4: memref<128x256xf32, #tpu.memory_space<vmem>>, %arg5: memref<128x1xf32, #tpu.memory_space<vmem>>, %arg6: memref<128x1xf32, #tpu.memory_space<vmem>>, %arg7: memref<1xf32, #tpu.memory_space<smem>>, %arg8: memref<1x8xf32, #tpu.memory_space<vmem>>) attributes {dimension_semantics = [#tpu.dimension_semantics<parallel>], iteration_bounds = array<i64: 1>, scalar_prefetch = 0 : i64, scratch_operands = 0 : i64, tpu.core_type = #tpu.core_type<tc>, window_params = [{transform_indices = @transform_0, window_bounds = array<i64: 32, 8>}, {pipeline_mode = #tpu.pipeline_mode<synchronous>, transform_indices = @transform_1, window_bounds = array<i64: 256, 32>}, {pipeline_mode = #tpu.pipeline_mode<synchronous>, transform_indices = @transform_2, window_bounds = array<i64: 256, 1>}, {pipeline_mode = #tpu.pipeline_mode<synchronous>, transform_indices = @transform_3, window_bounds = array<i64: 128, 256>}, {pipeline_mode = #tpu.pipeline_mode<synchronous>, transform_indices = @transform_4, window_bounds = array<i64: 128, 1>}, {pipeline_mode = #tpu.pipeline_mode<synchronous>, transform_indices = @transform_5, window_bounds = array<i64: 128, 1>}, {transform_indices = @transform_6, window_bounds = array<i64: 1>}, {transform_indices = @transform_7, window_bounds = array<i64: 1, 8>}]} {
    %c0 = arith.constant 0 : index
    %c0_0 = arith.constant 0 : index
    %0 = vector.load %arg1[%c0, %c0_0] : memref<32x8xf32, #tpu.memory_space<vmem>>, vector<32x8xf32>
    %c0_1 = arith.constant 0 : index
    %c0_2 = arith.constant 0 : index
    %1 = vector.load %arg2[%c0_1, %c0_2] : memref<256x32xf32, #tpu.memory_space<vmem>>, vector<256x32xf32>
    %cst = arith.constant dense<0.000000e+00> : vector<256x8xf32>
    %2 = tpu.matmul %1, %0, %cst {dimension_numbers = #tpu.dot_dimension_numbers<[1], [0], [0], [1], [0, 0, 1, 1], [], []>} : vector<256x32xf32>, vector<32x8xf32>, vector<256x8xf32> -> vector<256x8xf32>
    %c0_3 = arith.constant 0 : index
    %c0_4 = arith.constant 0 : index
    %3 = vector.load %arg3[%c0_3, %c0_4] : memref<256x1xf32, #tpu.memory_space<vmem>>, vector<256x1xf32>
    %4 = vector.broadcast %3 : vector<256x1xf32> to vector<256x8xf32>
    %5 = arith.addf %2, %4 : vector<256x8xf32>
    %cst_5 = arith.constant 0.000000e+00 : f32
    %6 = vector.broadcast %cst_5 : f32 to vector<256x8xf32>
    %7 = arith.maximumf %5, %6 : vector<256x8xf32>
    %c0_6 = arith.constant 0 : index
    %c0_7 = arith.constant 0 : index
    %8 = vector.load %arg4[%c0_6, %c0_7] : memref<128x256xf32, #tpu.memory_space<vmem>>, vector<128x256xf32>
    %cst_8 = arith.constant dense<0.000000e+00> : vector<128x8xf32>
    %9 = tpu.matmul %8, %7, %cst_8 {dimension_numbers = #tpu.dot_dimension_numbers<[1], [0], [0], [1], [0, 0, 1, 1], [], []>} : vector<128x256xf32>, vector<256x8xf32>, vector<128x8xf32> -> vector<128x8xf32>
    %c0_9 = arith.constant 0 : index
    %c0_10 = arith.constant 0 : index
    %10 = vector.load %arg5[%c0_9, %c0_10] : memref<128x1xf32, #tpu.memory_space<vmem>>, vector<128x1xf32>
    %11 = vector.broadcast %10 : vector<128x1xf32> to vector<128x8xf32>
    %12 = arith.addf %9, %11 : vector<128x8xf32>
    %cst_11 = arith.constant 0.000000e+00 : f32
    %13 = vector.broadcast %cst_11 : f32 to vector<128x8xf32>
    %14 = arith.maximumf %12, %13 : vector<128x8xf32>
    %c0_12 = arith.constant 0 : index
    %c0_13 = arith.constant 0 : index
    %15 = vector.load %arg6[%c0_12, %c0_13] : memref<128x1xf32, #tpu.memory_space<vmem>>, vector<128x1xf32>
    %16 = vector.broadcast %15 : vector<128x1xf32> to vector<128x8xf32>
    %17 = arith.mulf %14, %16 : vector<128x8xf32>
    %cst_14 = arith.constant dense<0.000000e+00> : vector<8xf32>
    %18 = vector.multi_reduction <add>, %17, %cst_14 [0] : vector<128x8xf32> to vector<8xf32>
    %19 = vector.shape_cast %18 : vector<8xf32> to vector<1x8xf32>
    %c0_15 = arith.constant 0 : index
    %20 = memref.load %arg7[%c0_15] : memref<1xf32, #tpu.memory_space<smem>>
    %21 = vector.broadcast %20 : f32 to vector<1x8xf32>
    %22 = arith.addf %19, %21 : vector<1x8xf32>
    %23 = arith.negf %22 : vector<1x8xf32>
    %24 = math.exp %23 : vector<1x8xf32>
    %cst_16 = arith.constant 1.000000e+00 : f32
    %25 = vector.broadcast %cst_16 : f32 to vector<1x8xf32>
    %26 = arith.addf %25, %24 : vector<1x8xf32>
    %27 = arith.divf %25, %26 : vector<1x8xf32>
    %c0_17 = arith.constant 0 : index
    %c0_18 = arith.constant 0 : index
    %28 = vector.load %arg8[%c0_17, %c0_18] : memref<1x8xf32, #tpu.memory_space<vmem>>, vector<1x8xf32>
    tpu.vector_store %arg8[%c0_17, %c0_18], %27 {strides = array<i32>} : memref<1x8xf32, #tpu.memory_space<vmem>>, vector<1x8xf32>,
    return
  }
  func.func @transform_0(%arg0: i32) -> (i32, i32) {
    %c0_i32 = arith.constant 0 : i32
    %c0_i32_0 = arith.constant 0 : i32
    return %c0_i32, %arg0 : i32, i32
  }
  func.func @transform_1(%arg0: i32) -> (i32, i32) {
    %c0_i32 = arith.constant 0 : i32
    %c0_i32_0 = arith.constant 0 : i32
    %c0_i32_1 = arith.constant 0 : i32
    return %c0_i32, %c0_i32_0 : i32, i32
  }
  func.func @transform_2(%arg0: i32) -> (i32, i32) {
    %c0_i32 = arith.constant 0 : i32
    %c0_i32_0 = arith.constant 0 : i32
    %c0_i32_1 = arith.constant 0 : i32
    return %c0_i32, %c0_i32_0 : i32, i32
  }
  func.func @transform_3(%arg0: i32) -> (i32, i32) {
    %c0_i32 = arith.constant 0 : i32
    %c0_i32_0 = arith.constant 0 : i32
    %c0_i32_1 = arith.constant 0 : i32
    return %c0_i32, %c0_i32_0 : i32, i32
  }
  func.func @transform_4(%arg0: i32) -> (i32, i32) {
    %c0_i32 = arith.constant 0 : i32
    %c0_i32_0 = arith.constant 0 : i32
    %c0_i32_1 = arith.constant 0 : i32
    return %c0_i32, %c0_i32_0 : i32, i32
  }
  func.func @transform_5(%arg0: i32) -> (i32, i32) {
    %c0_i32 = arith.constant 0 : i32
    %c0_i32_0 = arith.constant 0 : i32
    %c0_i32_1 = arith.constant 0 : i32
    return %c0_i32, %c0_i32_0 : i32, i32
  }
  func.func @transform_6(%arg0: i32) -> i32 {
    %c0_i32 = arith.constant 0 : i32
    %c0_i32_0 = arith.constant 0 : i32
    return %c0_i32 : i32
  }
  func.func @transform_7(%arg0: i32) -> (i32, i32) {
    %c0_i32 = arith.constant 0 : i32
    %c0_i32_0 = arith.constant 0 : i32
    return %c0_i32, %arg0 : i32, i32
  }
}

</mosaic_0001>

<llo_original>
// kernel: tpu_custom_call.1
$region0: #{tpu_custom_call.1}
  #allocation0 [shape = 'u32[]', space=smem, size = 0x4, offset = 0x4, fixed_abs, tag = 'smem constant byte address 0x4 - core index']
  #allocation1 [shape = 'u32[72,128]{1,0:T(1,128)}', space=vmem, size = 0x9000, scoped, tag = 'internal scratch']
  #allocation2 [shape = 'f32[1]{0:T(128)S(6)}', space=smem, size = 0x200, scoped, tag = 'scoped memory for tpu_custom_call.1']
  %s0 = inlined_call_operand.vmem [shape: f32[32,8], index: 0, kind: input, shape index: {}]
  %s1 = inlined_call_operand.vmem [shape: f32[256,32], index: 1, kind: input, shape index: {}]
  %s2 = inlined_call_operand.vmem [shape: f32[256,1], index: 2, kind: input, shape index: {}]
  %s3 = inlined_call_operand.vmem [shape: f32[128,256], index: 3, kind: input, shape index: {}]
  %s4 = inlined_call_operand.vmem [shape: f32[128,1], index: 4, kind: input, shape index: {}]
  %s5 = inlined_call_operand.vmem [shape: f32[128,1], index: 5, kind: input, shape index: {}]
  %s6 = inlined_call_operand.<no memory space> [shape: f32[1], index: 6, kind: input, shape index: {}]
  %s7 = inlined_call_operand.hbm [shape: f32[1,8], index: 7, kind: output, shape index: {}]
  %s8 = sld [smem:[#allocation0]]
  $region38: #{tpu_custom_call.1} parent=0
    _
  %s10 = ssub.s32 1, %s8
  %s11 = scalar_select 0, %s10, %s8
  %12 = sst [smem:[#allocation2]] %s6
  $region1: #{tpu_custom_call.1} parent=0
    #allocation3 [shape = 'u8[512]{0}', space=vmem, size = 0x400, scoped, tag = 'output window, operand 0, single buffered']
    #allocation4 [shape = 's32[1]{0}', space=sflag, size = 0x4, scoped, tag = 'scoped memory for tpu_custom_call.1']
    %13 = vsyncpa [#allocation4], 0
    // Predicated region
    $region2: #{tpu_custom_call.1} parent=1 // pred_check
      _
    $region3: #{tpu_custom_call.1} parent=1 // pred_check_branch
      %15 = sbr.rel (0) target = $region5
    $region4: #{tpu_custom_call.1} parent=1 // pred_region
      _
    $region5: #{tpu_custom_call.1} parent=1 // pred_fallthru
      _
    // Predicated region
    $region6: #{tpu_custom_call.1} parent=1 // pred_check
      _
    $region7: #{tpu_custom_call.1} parent=1 // pred_check_branch
      %17 = sbr.rel (0) target = $region9
    $region8: #{tpu_custom_call.1} parent=1 // pred_region
      _
    $region9: #{tpu_custom_call.1} parent=1 // pred_fallthru
      _
    // Predicated region
    $region10: #{tpu_custom_call.1} parent=1 // pred_check
      _
    $region11: #{tpu_custom_call.1} parent=1 // pred_check_branch
      %19 = sbr.rel (0) target = $region13
    $region12: #{tpu_custom_call.1} parent=1 // pred_region
      _
    $region13: #{tpu_custom_call.1} parent=1 // pred_fallthru
      _
    // Predicated region
    $region14: #{tpu_custom_call.1} parent=1 // pred_check
      _
    $region15: #{tpu_custom_call.1} parent=1 // pred_check_branch
      %21 = sbr.rel (0) target = $region17
    $region16: #{tpu_custom_call.1} parent=1 // pred_region
      _
    $region17: #{tpu_custom_call.1} parent=1 // pred_fallthru
      _
    // Predicated region
    $region18: #{tpu_custom_call.1} parent=1 // pred_check
      _
    $region19: #{tpu_custom_call.1} parent=1 // pred_check_branch
      %23 = sbr.rel (0) target = $region21
    $region20: #{tpu_custom_call.1} parent=1 // pred_region
      _
    $region21: #{tpu_custom_call.1} parent=1 // pred_fallthru
      _
    // Predicated region
    $region22: #{tpu_custom_call.1} parent=1 // pred_check
      _
    $region23: #{tpu_custom_call.1} parent=1 // pred_check_branch
      %25 = sbr.rel (0) target = $region25
    $region24: #{tpu_custom_call.1} parent=1 // pred_region
      _
    $region25: #{tpu_custom_call.1} parent=1 // pred_fallthru
      _
    // Predicated region
    $region26: #{tpu_custom_call.1} parent=1 // pred_check
      _
    $region27: #{tpu_custom_call.1} parent=1 // pred_check_branch
      %27 = sbr.rel (0) target = $region29
    $region28: #{tpu_custom_call.1} parent=1 // pred_region
      _
    $region29: #{tpu_custom_call.1} parent=1 // pred_fallthru
      _
    %v28 = vld [vmem:[%s0] sm:$0xff]
    %v29 = vld [vmem:[%s0 + $0x8] sm:$0xff]
    %v30 = vld [vmem:[%s0 + $0x10] sm:$0xff]
    %v31 = vld [vmem:[%s0 + $0x18] sm:$0xff]
    %v32 = vld [vmem:[%s1] sm:$0xff]
    %v33 = vld [vmem:[%s1 + $0x8] sm:$0xff]
    %v34 = vld [vmem:[%s1 + $0x10] sm:$0xff]
    %v35 = vld [vmem:[%s1 + $0x18] sm:$0xff]
    %v36 = vld [vmem:[%s1 + $0x20] sm:$0xff]
    %v37 = vld [vmem:[%s1 + $0x28] sm:$0xff]
    %v38 = vld [vmem:[%s1 + $0x30] sm:$0xff]
    %v39 = vld [vmem:[%s1 + $0x38] sm:$0xff]
    %v40 = vld [vmem:[%s1 + $0x40] sm:$0xff]
    %v41 = vld [vmem:[%s1 + $0x48] sm:$0xff]
    %v42 = vld [vmem:[%s1 + $0x50] sm:$0xff]
    %v43 = vld [vmem:[%s1 + $0x58] sm:$0xff]
    %v44 = vld [vmem:[%s1 + $0x60] sm:$0xff]
    %v45 = vld [vmem:[%s1 + $0x68] sm:$0xff]
    %v46 = vld [vmem:[%s1 + $0x70] sm:$0xff]
    %v47 = vld [vmem:[%s1 + $0x78] sm:$0xff]
    %v48 = vld [vmem:[%s1 + $0x80] sm:$0xff]
    %v49 = vld [vmem:[%s1 + $0x88] sm:$0xff]
    %v50 = vld [vmem:[%s1 + $0x90] sm:$0xff]
    %v51 = vld [vmem:[%s1 + $0x98] sm:$0xff]
    %v52 = vld [vmem:[%s1 + $0xa0] sm:$0xff]
    %v53 = vld [vmem:[%s1 + $0xa8] sm:$0xff]
    %v54 = vld [vmem:[%s1 + $0xb0] sm:$0xff]
    %v55 = vld [vmem:[%s1 + $0xb8] sm:$0xff]
    %v56 = vld [vmem:[%s1 + $0xc0] sm:$0xff]
    %v57 = vld [vmem:[%s1 + $0xc8] sm:$0xff]
    %v58 = vld [vmem:[%s1 + $0xd0] sm:$0xff]
    %v59 = vld [vmem:[%s1 + $0xd8] sm:$0xff]
    %v60 = vld [vmem:[%s1 + $0xe0] sm:$0xff]
    %v61 = vld [vmem:[%s1 + $0xe8] sm:$0xff]
    %v62 = vld [vmem:[%s1 + $0xf0] sm:$0xff]
    %v63 = vld [vmem:[%s1 + $0xf8] sm:$0xff]
    %v64 = vld [vmem:[%s2] sm:$0xff]
    %v65 = vld [vmem:[%s2 + $0x8] sm:$0xff]
    %v66 = vld [vmem:[%s2 + $0x10] sm:$0xff]
    %v67 = vld [vmem:[%s2 + $0x18] sm:$0xff]
    %v68 = vld [vmem:[%s2 + $0x20] sm:$0xff]
    %v69 = vld [vmem:[%s2 + $0x28] sm:$0xff]
    %v70 = vld [vmem:[%s2 + $0x30] sm:$0xff]
    %v71 = vld [vmem:[%s2 + $0x38] sm:$0xff]
    %v72 = vld [vmem:[%s2 + $0x40] sm:$0xff]
    %v73 = vld [vmem:[%s2 + $0x48] sm:$0xff]
    %v74 = vld [vmem:[%s2 + $0x50] sm:$0xff]
    %v75 = vld [vmem:[%s2 + $0x58] sm:$0xff]
    %v76 = vld [vmem:[%s2 + $0x60] sm:$0xff]
    %v77 = vld [vmem:[%s2 + $0x68] sm:$0xff]
    %v78 = vld [vmem:[%s2 + $0x70] sm:$0xff]
    %v79 = vld [vmem:[%s2 + $0x78] sm:$0xff]
    %v80 = vld [vmem:[%s2 + $0x80] sm:$0xff]
    %v81 = vld [vmem:[%s2 + $0x88] sm:$0xff]
    %v82 = vld [vmem:[%s2 + $0x90] sm:$0xff]
    %v83 = vld [vmem:[%s2 + $0x98] sm:$0xff]
    %v84 = vld [vmem:[%s2 + $0xa0] sm:$0xff]
    %v85 = vld [vmem:[%s2 + $0xa8] sm:$0xff]
    %v86 = vld [vmem:[%s2 + $0xb0] sm:$0xff]
    %v87 = vld [vmem:[%s2 + $0xb8] sm:$0xff]
    %v88 = vld [vmem:[%s2 + $0xc0] sm:$0xff]
    %v89 = vld [vmem:[%s2 + $0xc8] sm:$0xff]
    %v90 = vld [vmem:[%s2 + $0xd0] sm:$0xff]
    %v91 = vld [vmem:[%s2 + $0xd8] sm:$0xff]
    %v92 = vld [vmem:[%s2 + $0xe0] sm:$0xff]
    %v93 = vld [vmem:[%s2 + $0xe8] sm:$0xff]
    %v94 = vld [vmem:[%s2 + $0xf0] sm:$0xff]
    %v95 = vld [vmem:[%s2 + $0xf8] sm:$0xff]
    %97 = vset.pattern.permute.xlu0 0
    %98 = vperm.xlu0 %97, %v64
    %v99 = vpop.permute.xlu0 %98
    %102 = vset.pattern.permute.xlu0 0
    %103 = vperm.xlu0 %102, %v65
    %v104 = vpop.permute.xlu0 %103
    %107 = vset.pattern.permute.xlu0 0
    %108 = vperm.xlu0 %107, %v66
    %v109 = vpop.permute.xlu0 %108
    %112 = vset.pattern.permute.xlu0 0
    %113 = vperm.xlu0 %112, %v67
    %v114 = vpop.permute.xlu0 %113
    %117 = vset.pattern.permute.xlu0 0
    %118 = vperm.xlu0 %117, %v68
    %v119 = vpop.permute.xlu0 %118
    %122 = vset.pattern.permute.xlu0 0
    %123 = vperm.xlu0 %122, %v69
    %v124 = vpop.permute.xlu0 %123
    %127 = vset.pattern.permute.xlu0 0
    %128 = vperm.xlu0 %127, %v70
    %v129 = vpop.permute.xlu0 %128
    %132 = vset.pattern.permute.xlu0 0
    %133 = vperm.xlu0 %132, %v71
    %v134 = vpop.permute.xlu0 %133
    %137 = vset.pattern.permute.xlu0 0
    %138 = vperm.xlu0 %137, %v72
    %v139 = vpop.permute.xlu0 %138
    %142 = vset.pattern.permute.xlu0 0
    %143 = vperm.xlu0 %142, %v73
    %v144 = vpop.permute.xlu0 %143
    %147 = vset.pattern.permute.xlu0 0
    %148 = vperm.xlu0 %147, %v74
    %v149 = vpop.permute.xlu0 %148
    %152 = vset.pattern.permute.xlu0 0
    %153 = vperm.xlu0 %152, %v75
    %v154 = vpop.permute.xlu0 %153
    %157 = vset.pattern.permute.xlu0 0
    %158 = vperm.xlu0 %157, %v76
    %v159 = vpop.permute.xlu0 %158
    %162 = vset.pattern.permute.xlu0 0
    %163 = vperm.xlu0 %162, %v77
    %v164 = vpop.permute.xlu0 %163
    %167 = vset.pattern.permute.xlu0 0
    %168 = vperm.xlu0 %167, %v78
    %v169 = vpop.permute.xlu0 %168
    %172 = vset.pattern.permute.xlu0 0
    %173 = vperm.xlu0 %172, %v79
    %v174 = vpop.permute.xlu0 %173
    %177 = vset.pattern.permute.xlu0 0
    %178 = vperm.xlu0 %177, %v80
    %v179 = vpop.permute.xlu0 %178
    %182 = vset.pattern.permute.xlu0 0
    %183 = vperm.xlu0 %182, %v81
    %v184 = vpop.permute.xlu0 %183
    %187 = vset.pattern.permute.xlu0 0
    %188 = vperm.xlu0 %187, %v82
    %v189 = vpop.permute.xlu0 %188
    %192 = vset.pattern.permute.xlu0 0
    %193 = vperm.xlu0 %192, %v83
    %v194 = vpop.permute.xlu0 %193
    %197 = vset.pattern.permute.xlu0 0
    %198 = vperm.xlu0 %197, %v84
    %v199 = vpop.permute.xlu0 %198
    %202 = vset.pattern.permute.xlu0 0
    %203 = vperm.xlu0 %202, %v85
    %v204 = vpop.permute.xlu0 %203
    %207 = vset.pattern.permute.xlu0 0
    %208 = vperm.xlu0 %207, %v86
    %v209 = vpop.permute.xlu0 %208
    %212 = vset.pattern.permute.xlu0 0
    %213 = vperm.xlu0 %212, %v87
    %v214 = vpop.permute.xlu0 %213
    %217 = vset.pattern.permute.xlu0 0
    %218 = vperm.xlu0 %217, %v88
    %v219 = vpop.permute.xlu0 %218
    %222 = vset.pattern.permute.xlu0 0
    %223 = vperm.xlu0 %222, %v89
    %v224 = vpop.permute.xlu0 %223
    %227 = vset.pattern.permute.xlu0 0
    %228 = vperm.xlu0 %227, %v90
    %v229 = vpop.permute.xlu0 %228
    %232 = vset.pattern.permute.xlu0 0
    %233 = vperm.xlu0 %232, %v91
    %v234 = vpop.permute.xlu0 %233
    %237 = vset.pattern.permute.xlu0 0
    %238 = vperm.xlu0 %237, %v92
    %v239 = vpop.permute.xlu0 %238
    %242 = vset.pattern.permute.xlu0 0
    %243 = vperm.xlu0 %242, %v93
    %v244 = vpop.permute.xlu0 %243
    %247 = vset.pattern.permute.xlu0 0
    %248 = vperm.xlu0 %247, %v94
    %v249 = vpop.permute.xlu0 %248
    %252 = vset.pattern.permute.xlu0 0
    %253 = vperm.xlu0 %252, %v95
    %v254 = vpop.permute.xlu0 %253
    %vm256 = vcmask 261120
    %v258 = vsel %vm256, %v32, 0
    %v261 = vsel %vm256, %v33, 0
    %v264 = vsel %vm256, %v34, 0
    %v267 = vsel %vm256, %v35, 0
    %v270 = vsel %vm256, %v36, 0
    %v273 = vsel %vm256, %v37, 0
    %v276 = vsel %vm256, %v38, 0
    %v279 = vsel %vm256, %v39, 0
    %v282 = vsel %vm256, %v40, 0
    %v285 = vsel %vm256, %v41, 0
    %v288 = vsel %vm256, %v42, 0
    %v291 = vsel %vm256, %v43, 0
    %v294 = vsel %vm256, %v44, 0
    %v297 = vsel %vm256, %v45, 0
    %v300 = vsel %vm256, %v46, 0
    %v303 = vsel %vm256, %v47, 0
    %v306 = vsel %vm256, %v48, 0
    %v309 = vsel %vm256, %v49, 0
    %v312 = vsel %vm256, %v50, 0
    %v315 = vsel %vm256, %v51, 0
    %v318 = vsel %vm256, %v52, 0
    %v321 = vsel %vm256, %v53, 0
    %v324 = vsel %vm256, %v54, 0
    %v327 = vsel %vm256, %v55, 0
    %v330 = vsel %vm256, %v56, 0
    %v333 = vsel %vm256, %v57, 0
    %v336 = vsel %vm256, %v58, 0
    %v339 = vsel %vm256, %v59, 0
    %v342 = vsel %vm256, %v60, 0
    %v345 = vsel %vm256, %v61, 0
    %v348 = vsel %vm256, %v62, 0
    %v351 = vsel %vm256, %v63, 0
    %353 = vmatpush.msra.mxu0 0.0
    %354 = vmatpush.msra.mxu0 0.0
    %355 = vmatpush.msra.mxu0 0.0
    %356 = vmatpush.msra.mxu0 0.0
    %357 = vmatpush.msra.mxu0 0.0
    %358 = vmatpush.msra.mxu0 0.0
    %359 = vmatpush.msra.mxu0 0.0
    %360 = vmatpush.msra.mxu0 0.0
    %361 = vmatpush.msra.mxu0 0.0
    %362 = vmatpush.msra.mxu0 0.0
    %363 = vmatpush.msra.mxu0 0.0
    %364 = vmatpush.msra.mxu0 0.0
    %365 = vmatpush.msra.mxu0 %v31
    %366 = vmatpush.msra.mxu0 %v30
    %367 = vmatpush.msra.mxu0 %v29
    %368 = vmatpush.msra.mxu0 %v28
    %369 = vmatmul.f32.gmra.mxu0 %v258
    %v370 = vpop.f32.mrf.mxu0
    %v371 = vadd.f32 %v99, %v370
    %372 = vmatmul.f32.gmra.mxu0 %v261
    %v373 = vpop.f32.mrf.mxu0
    %v374 = vadd.f32 %v104, %v373
    %375 = vmatmul.f32.gmra.mxu0 %v264
    %v376 = vpop.f32.mrf.mxu0
    %v377 = vadd.f32 %v109, %v376
    %378 = vmatmul.f32.gmra.mxu0 %v267
    %v379 = vpop.f32.mrf.mxu0
    %v380 = vadd.f32 %v114, %v379
    %381 = vmatmul.f32.gmra.mxu0 %v270
    %v382 = vpop.f32.mrf.mxu0
    %v383 = vadd.f32 %v119, %v382
    %384 = vmatmul.f32.gmra.mxu0 %v273
    %v385 = vpop.f32.mrf.mxu0
    %v386 = vadd.f32 %v124, %v385
    %387 = vmatmul.f32.gmra.mxu0 %v276
    %v388 = vpop.f32.mrf.mxu0
    %v389 = vadd.f32 %v129, %v388
    %390 = vmatmul.f32.gmra.mxu0 %v279
    %v391 = vpop.f32.mrf.mxu0
    %v392 = vadd.f32 %v134, %v391
    %393 = vmatmul.f32.gmra.mxu0 %v282
    %v394 = vpop.f32.mrf.mxu0
    %v395 = vadd.f32 %v139, %v394
    %396 = vmatmul.f32.gmra.mxu0 %v285
    %v397 = vpop.f32.mrf.mxu0
    %v398 = vadd.f32 %v144, %v397
    %399 = vmatmul.f32.gmra.mxu0 %v288
    %v400 = vpop.f32.mrf.mxu0
    %v401 = vadd.f32 %v149, %v400
    %402 = vmatmul.f32.gmra.mxu0 %v291
    %v403 = vpop.f32.mrf.mxu0
    %v404 = vadd.f32 %v154, %v403
    %405 = vmatmul.f32.gmra.mxu0 %v294
    %v406 = vpop.f32.mrf.mxu0
    %v407 = vadd.f32 %v159, %v406
    %408 = vmatmul.f32.gmra.mxu0 %v297
    %v409 = vpop.f32.mrf.mxu0
    %v410 = vadd.f32 %v164, %v409
    %411 = vmatmul.f32.gmra.mxu0 %v300
    %v412 = vpop.f32.mrf.mxu0
    %v413 = vadd.f32 %v169, %v412
    %414 = vmatmul.f32.gmra.mxu0 %v303
    %v415 = vpop.f32.mrf.mxu0
    %v416 = vadd.f32 %v174, %v415
    %417 = vmatmul.f32.gmra.mxu0 %v306
    %v418 = vpop.f32.mrf.mxu0
    %v419 = vadd.f32 %v179, %v418
    %420 = vmatmul.f32.gmra.mxu0 %v309
    %v421 = vpop.f32.mrf.mxu0
    %v422 = vadd.f32 %v184, %v421
    %423 = vmatmul.f32.gmra.mxu0 %v312
    %v424 = vpop.f32.mrf.mxu0
    %v425 = vadd.f32 %v189, %v424
    %426 = vmatmul.f32.gmra.mxu0 %v315
    %v427 = vpop.f32.mrf.mxu0
    %v428 = vadd.f32 %v194, %v427
    %429 = vmatmul.f32.gmra.mxu0 %v318
    %v430 = vpop.f32.mrf.mxu0
    %v431 = vadd.f32 %v199, %v430
    %432 = vmatmul.f32.gmra.mxu0 %v321
    %v433 = vpop.f32.mrf.mxu0
    %v434 = vadd.f32 %v204, %v433
    %435 = vmatmul.f32.gmra.mxu0 %v324
    %v436 = vpop.f32.mrf.mxu0
    %v437 = vadd.f32 %v209, %v436
    %438 = vmatmul.f32.gmra.mxu0 %v327
    %v439 = vpop.f32.mrf.mxu0
    %v440 = vadd.f32 %v214, %v439
    %441 = vmatmul.f32.gmra.mxu0 %v330
    %v442 = vpop.f32.mrf.mxu0
    %v443 = vadd.f32 %v219, %v442
    %444 = vmatmul.f32.gmra.mxu0 %v333
    %v445 = vpop.f32.mrf.mxu0
    %v446 = vadd.f32 %v224, %v445
    %447 = vmatmul.f32.gmra.mxu0 %v336
    %v448 = vpop.f32.mrf.mxu0
    %v449 = vadd.f32 %v229, %v448
    %450 = vmatmul.f32.gmra.mxu0 %v339
    %v451 = vpop.f32.mrf.mxu0
    %v452 = vadd.f32 %v234, %v451
    %453 = vmatmul.f32.gmra.mxu0 %v342
    %v454 = vpop.f32.mrf.mxu0
    %v455 = vadd.f32 %v239, %v454
    %456 = vmatmul.f32.gmra.mxu0 %v345
    %v457 = vpop.f32.mrf.mxu0
    %v458 = vadd.f32 %v244, %v457
    %459 = vmatmul.f32.gmra.mxu0 %v348
    %v460 = vpop.f32.mrf.mxu0
    %v461 = vadd.f32 %v249, %v460
    %462 = vmatmul.f32.gmra.mxu0 %v351
    %v463 = vpop.f32.mrf.mxu0
    %v464 = vadd.f32 %v254, %v463
    %465 = vdwg.mxu0
    %v466 = vmax.f32 %v371, 0.0
    %v467 = vmax.f32 %v374, 0.0
    %v468 = vmax.f32 %v377, 0.0
    %v469 = vmax.f32 %v380, 0.0
    %v470 = vmax.f32 %v383, 0.0
    %v471 = vmax.f32 %v386, 0.0
    %v472 = vmax.f32 %v389, 0.0
    %v473 = vmax.f32 %v392, 0.0
    %v474 = vmax.f32 %v395, 0.0
    %v475 = vmax.f32 %v398, 0.0
    %v476 = vmax.f32 %v401, 0.0
    %v477 = vmax.f32 %v404, 0.0
    %v478 = vmax.f32 %v407, 0.0
    %v479 = vmax.f32 %v410, 0.0
    %v480 = vmax.f32 %v413, 0.0
    %v481 = vmax.f32 %v416, 0.0
    %v482 = vmax.f32 %v419, 0.0
    %v483 = vmax.f32 %v422, 0.0
    %v484 = vmax.f32 %v425, 0.0
    %v485 = vmax.f32 %v428, 0.0
    %v486 = vmax.f32 %v431, 0.0
    %v487 = vmax.f32 %v434, 0.0
    %v488 = vmax.f32 %v437, 0.0
    %v489 = vmax.f32 %v440, 0.0
    %v490 = vmax.f32 %v443, 0.0
    %v491 = vmax.f32 %v446, 0.0
    %v492 = vmax.f32 %v449, 0.0
    %v493 = vmax.f32 %v452, 0.0
    %v494 = vmax.f32 %v455, 0.0
    %v495 = vmax.f32 %v458, 0.0
    %v496 = vmax.f32 %v461, 0.0
    %v497 = vmax.f32 %v464, 0.0
    %v498 = vld [vmem:[%s3] sm:$0xff]
    %v499 = vld [vmem:[%s3 + $0x8] sm:$0xff]
    %v500 = vld [vmem:[%s3 + $0x10] sm:$0xff]
    %v501 = vld [vmem:[%s3 + $0x18] sm:$0xff]
    %v502 = vld [vmem:[%s3 + $0x20] sm:$0xff]
    %v503 = vld [vmem:[%s3 + $0x28] sm:$0xff]
    %v504 = vld [vmem:[%s3 + $0x30] sm:$0xff]
    %v505 = vld [vmem:[%s3 + $0x38] sm:$0xff]
    %v506 = vld [vmem:[%s3 + $0x40] sm:$0xff]
    %v507 = vld [vmem:[%s3 + $0x48] sm:$0xff]
    %v508 = vld [vmem:[%s3 + $0x50] sm:$0xff]
    %v509 = vld [vmem:[%s3 + $0x58] sm:$0xff]
    %v510 = vld [vmem:[%s3 + $0x60] sm:$0xff]
    %v511 = vld [vmem:[%s3 + $0x68] sm:$0xff]
    %v512 = vld [vmem:[%s3 + $0x70] sm:$0xff]
    %v513 = vld [vmem:[%s3 + $0x78] sm:$0xff]
    %v514 = vld [vmem:[%s3 + $0x80] sm:$0xff]
    %v515 = vld [vmem:[%s3 + $0x88] sm:$0xff]
    %v516 = vld [vmem:[%s3 + $0x90] sm:$0xff]
    %v517 = vld [vmem:[%s3 + $0x98] sm:$0xff]
    %v518 = vld [vmem:[%s3 + $0xa0] sm:$0xff]
    %v519 = vld [vmem:[%s3 + $0xa8] sm:$0xff]
    %v520 = vld [vmem:[%s3 + $0xb0] sm:$0xff]
    %v521 = vld [vmem:[%s3 + $0xb8] sm:$0xff]
    %v522 = vld [vmem:[%s3 + $0xc0] sm:$0xff]
    %v523 = vld [vmem:[%s3 + $0xc8] sm:$0xff]
    %v524 = vld [vmem:[%s3 + $0xd0] sm:$0xff]
    %v525 = vld [vmem:[%s3 + $0xd8] sm:$0xff]
    %v526 = vld [vmem:[%s3 + $0xe0] sm:$0xff]
    %v527 = vld [vmem:[%s3 + $0xe8] sm:$0xff]
    %v528 = vld [vmem:[%s3 + $0xf0] sm:$0xff]
    %v529 = vld [vmem:[%s3 + $0xf8] sm:$0xff]
    %v530 = vld [vmem:[%s4] sm:$0xff]
    %v531 = vld [vmem:[%s4 + $0x8] sm:$0xff]
    %v532 = vld [vmem:[%s4 + $0x10] sm:$0xff]
    %v533 = vld [vmem:[%s4 + $0x18] sm:$0xff]
    %v534 = vld [vmem:[%s4 + $0x20] sm:$0xff]
    %v535 = vld [vmem:[%s4 + $0x28] sm:$0xff]
    %v536 = vld [vmem:[%s4 + $0x30] sm:$0xff]
    %v537 = vld [vmem:[%s4 + $0x38] sm:$0xff]
    %v538 = vld [vmem:[%s4 + $0x40] sm:$0xff]
    %v539 = vld [vmem:[%s4 + $0x48] sm:$0xff]
    %v540 = vld [vmem:[%s4 + $0x50] sm:$0xff]
    %v541 = vld [vmem:[%s4 + $0x58] sm:$0xff]
    %v542 = vld [vmem:[%s4 + $0x60] sm:$0xff]
    %v543 = vld [vmem:[%s4 + $0x68] sm:$0xff]
    %v544 = vld [vmem:[%s4 + $0x70] sm:$0xff]
    %v545 = vld [vmem:[%s4 + $0x78] sm:$0xff]
    %547 = vset.pattern.permute.xlu0 0
    %548 = vperm.xlu0 %547, %v530
    %v549 = vpop.permute.xlu0 %548
    %552 = vset.pattern.permute.xlu0 0
    %553 = vperm.xlu0 %552, %v531
    %v554 = vpop.permute.xlu0 %553
    %557 = vset.pattern.permute.xlu0 0
    %558 = vperm.xlu0 %557, %v532
    %v559 = vpop.permute.xlu0 %558
    %562 = vset.pattern.permute.xlu0 0
    %563 = vperm.xlu0 %562, %v533
    %v564 = vpop.permute.xlu0 %563
    %567 = vset.pattern.permute.xlu0 0
    %568 = vperm.xlu0 %567, %v534
    %v569 = vpop.permute.xlu0 %568
    %572 = vset.pattern.permute.xlu0 0
    %573 = vperm.xlu0 %572, %v535
    %v574 = vpop.permute.xlu0 %573
    %577 = vset.pattern.permute.xlu0 0
    %578 = vperm.xlu0 %577, %v536
    %v579 = vpop.permute.xlu0 %578
    %582 = vset.pattern.permute.xlu0 0
    %583 = vperm.xlu0 %582, %v537
    %v584 = vpop.permute.xlu0 %583
    %587 = vset.pattern.permute.xlu0 0
    %588 = vperm.xlu0 %587, %v538
    %v589 = vpop.permute.xlu0 %588
    %592 = vset.pattern.permute.xlu0 0
    %593 = vperm.xlu0 %592, %v539
    %v594 = vpop.permute.xlu0 %593
    %597 = vset.pattern.permute.xlu0 0
    %598 = vperm.xlu0 %597, %v540
    %v599 = vpop.permute.xlu0 %598
    %602 = vset.pattern.permute.xlu0 0
    %603 = vperm.xlu0 %602, %v541
    %v604 = vpop.permute.xlu0 %603
    %607 = vset.pattern.permute.xlu0 0
    %608 = vperm.xlu0 %607, %v542
    %v609 = vpop.permute.xlu0 %608
    %612 = vset.pattern.permute.xlu0 0
    %613 = vperm.xlu0 %612, %v543
    %v614 = vpop.permute.xlu0 %613
    %617 = vset.pattern.permute.xlu0 0
    %618 = vperm.xlu0 %617, %v544
    %v619 = vpop.permute.xlu0 %618
    %622 = vset.pattern.permute.xlu0 0
    %623 = vperm.xlu0 %622, %v545
    %v624 = vpop.permute.xlu0 %623
    %626 = vmatpush.msra.mxu0 %v481
    %627 = vmatpush.msra.mxu0 %v480
    %628 = vmatpush.msra.mxu0 %v479
    %629 = vmatpush.msra.mxu0 %v478
    %630 = vmatpush.msra.mxu0 %v477
    %631 = vmatpush.msra.mxu0 %v476
    %632 = vmatpush.msra.mxu0 %v475
    %633 = vmatpush.msra.mxu0 %v474
    %634 = vmatpush.msra.mxu0 %v473
    %635 = vmatpush.msra.mxu0 %v472
    %636 = vmatpush.msra.mxu0 %v471
    %637 = vmatpush.msra.mxu0 %v470
    %638 = vmatpush.msra.mxu0 %v469
    %639 = vmatpush.msra.mxu0 %v468
    %640 = vmatpush.msra.mxu0 %v467
    %641 = vmatpush.msra.mxu0 %v466
    %642 = vmatmul.f32.gmra.mxu0 %v498
    %v643 = vpop.f32.mrf.mxu0
    %v644 = vadd.f32 %v549, %v643
    %645 = vmatmul.f32.gmra.mxu0 %v500
    %v646 = vpop.f32.mrf.mxu0
    %v647 = vadd.f32 %v554, %v646
    %648 = vmatmul.f32.gmra.mxu0 %v502
    %v649 = vpop.f32.mrf.mxu0
    %v650 = vadd.f32 %v559, %v649
    %651 = vmatmul.f32.gmra.mxu0 %v504
    %v652 = vpop.f32.mrf.mxu0
    %v653 = vadd.f32 %v564, %v652
    %654 = vmatmul.f32.gmra.mxu0 %v506
    %v655 = vpop.f32.mrf.mxu0
    %v656 = vadd.f32 %v569, %v655
    %657 = vmatmul.f32.gmra.mxu0 %v508
    %v658 = vpop.f32.mrf.mxu0
    %v659 = vadd.f32 %v574, %v658
    %660 = vmatmul.f32.gmra.mxu0 %v510
    %v661 = vpop.f32.mrf.mxu0
    %v662 = vadd.f32 %v579, %v661
    %663 = vmatmul.f32.gmra.mxu0 %v512
    %v664 = vpop.f32.mrf.mxu0
    %v665 = vadd.f32 %v584, %v664
    %666 = vmatmul.f32.gmra.mxu0 %v514
    %v667 = vpop.f32.mrf.mxu0
    %v668 = vadd.f32 %v589, %v667
    %669 = vmatmul.f32.gmra.mxu0 %v516
    %v670 = vpop.f32.mrf.mxu0
    %v671 = vadd.f32 %v594, %v670
    %672 = vmatmul.f32.gmra.mxu0 %v518
    %v673 = vpop.f32.mrf.mxu0
    %v674 = vadd.f32 %v599, %v673
    %675 = vmatmul.f32.gmra.mxu0 %v520
    %v676 = vpop.f32.mrf.mxu0
    %v677 = vadd.f32 %v604, %v676
    %678 = vmatmul.f32.gmra.mxu0 %v522
    %v679 = vpop.f32.mrf.mxu0
    %v680 = vadd.f32 %v609, %v679
    %681 = vmatmul.f32.gmra.mxu0 %v524
    %v682 = vpop.f32.mrf.mxu0
    %v683 = vadd.f32 %v614, %v682
    %684 = vmatmul.f32.gmra.mxu0 %v526
    %v685 = vpop.f32.mrf.mxu0
    %v686 = vadd.f32 %v619, %v685
    %687 = vmatmul.f32.gmra.mxu0 %v528
    %v688 = vpop.f32.mrf.mxu0
    %v689 = vadd.f32 %v624, %v688
    %690 = vdwg.mxu0
    %691 = vmatpush.msra.mxu0 %v497
    %692 = vmatpush.msra.mxu0 %v496
    %693 = vmatpush.msra.mxu0 %v495
    %694 = vmatpush.msra.mxu0 %v494
    %695 = vmatpush.msra.mxu0 %v493
    %696 = vmatpush.msra.mxu0 %v492
    %697 = vmatpush.msra.mxu0 %v491
    %698 = vmatpush.msra.mxu0 %v490
    %699 = vmatpush.msra.mxu0 %v489
    %700 = vmatpush.msra.mxu0 %v488
    %701 = vmatpush.msra.mxu0 %v487
    %702 = vmatpush.msra.mxu0 %v486
    %703 = vmatpush.msra.mxu0 %v485
    %704 = vmatpush.msra.mxu0 %v484
    %705 = vmatpush.msra.mxu0 %v483
    %706 = vmatpush.msra.mxu0 %v482
    %707 = vmatmul.f32.gmra.mxu0 %v499
    %v708 = vpop.f32.mrf.mxu0
    %v709 = vadd.f32 %v644, %v708
    %710 = vmatmul.f32.gmra.mxu0 %v501
    %v711 = vpop.f32.mrf.mxu0
    %v712 = vadd.f32 %v647, %v711
    %713 = vmatmul.f32.gmra.mxu0 %v503
    %v714 = vpop.f32.mrf.mxu0
    %v715 = vadd.f32 %v650, %v714
    %716 = vmatmul.f32.gmra.mxu0 %v505
    %v717 = vpop.f32.mrf.mxu0
    %v718 = vadd.f32 %v653, %v717
    %719 = vmatmul.f32.gmra.mxu0 %v507
    %v720 = vpop.f32.mrf.mxu0
    %v721 = vadd.f32 %v656, %v720
    %722 = vmatmul.f32.gmra.mxu0 %v509
    %v723 = vpop.f32.mrf.mxu0
    %v724 = vadd.f32 %v659, %v723
    %725 = vmatmul.f32.gmra.mxu0 %v511
    %v726 = vpop.f32.mrf.mxu0
    %v727 = vadd.f32 %v662, %v726
    %728 = vmatmul.f32.gmra.mxu0 %v513
    %v729 = vpop.f32.mrf.mxu0
    %v730 = vadd.f32 %v665, %v729
    %731 = vmatmul.f32.gmra.mxu0 %v515
    %v732 = vpop.f32.mrf.mxu0
    %v733 = vadd.f32 %v668, %v732
    %734 = vmatmul.f32.gmra.mxu0 %v517
    %v735 = vpop.f32.mrf.mxu0
    %v736 = vadd.f32 %v671, %v735
    %737 = vmatmul.f32.gmra.mxu0 %v519
    %v738 = vpop.f32.mrf.mxu0
    %v739 = vadd.f32 %v674, %v738
    %740 = vmatmul.f32.gmra.mxu0 %v521
    %v741 = vpop.f32.mrf.mxu0
    %v742 = vadd.f32 %v677, %v741
    %743 = vmatmul.f32.gmra.mxu0 %v523
    %v744 = vpop.f32.mrf.mxu0
    %v745 = vadd.f32 %v680, %v744
    %746 = vmatmul.f32.gmra.mxu0 %v525
    %v747 = vpop.f32.mrf.mxu0
    %v748 = vadd.f32 %v683, %v747
    %749 = vmatmul.f32.gmra.mxu0 %v527
    %v750 = vpop.f32.mrf.mxu0
    %v751 = vadd.f32 %v686, %v750
    %752 = vmatmul.f32.gmra.mxu0 %v529
    %v753 = vpop.f32.mrf.mxu0
    %v754 = vadd.f32 %v689, %v753
    %755 = vdwg.mxu0
    %v756 = vmax.f32 %v709, 0.0
    %v757 = vmax.f32 %v712, 0.0
    %v758 = vmax.f32 %v715, 0.0
    %v759 = vmax.f32 %v718, 0.0
    %v760 = vmax.f32 %v721, 0.0
    %v761 = vmax.f32 %v724, 0.0
    %v762 = vmax.f32 %v727, 0.0
    %v763 = vmax.f32 %v730, 0.0
    %v764 = vmax.f32 %v733, 0.0
    %v765 = vmax.f32 %v736, 0.0
    %v766 = vmax.f32 %v739, 0.0
    %v767 = vmax.f32 %v742, 0.0
    %v768 = vmax.f32 %v745, 0.0
    %v769 = vmax.f32 %v748, 0.0
    %v770 = vmax.f32 %v751, 0.0
    %v771 = vmax.f32 %v754, 0.0
    %v772 = vld [vmem:[%s5] sm:$0xff]
    %v773 = vld [vmem:[%s5 + $0x8] sm:$0xff]
    %v774 = vld [vmem:[%s5 + $0x10] sm:$0xff]
    %v775 = vld [vmem:[%s5 + $0x18] sm:$0xff]
    %v776 = vld [vmem:[%s5 + $0x20] sm:$0xff]
    %v777 = vld [vmem:[%s5 + $0x28] sm:$0xff]
    %v778 = vld [vmem:[%s5 + $0x30] sm:$0xff]
    %v779 = vld [vmem:[%s5 + $0x38] sm:$0xff]
    %v780 = vld [vmem:[%s5 + $0x40] sm:$0xff]
    %v781 = vld [vmem:[%s5 + $0x48] sm:$0xff]
    %v782 = vld [vmem:[%s5 + $0x50] sm:$0xff]
    %v783 = vld [vmem:[%s5 + $0x58] sm:$0xff]
    %v784 = vld [vmem:[%s5 + $0x60] sm:$0xff]
    %v785 = vld [vmem:[%s5 + $0x68] sm:$0xff]
    %v786 = vld [vmem:[%s5 + $0x70] sm:$0xff]
    %v787 = vld [vmem:[%s5 + $0x78] sm:$0xff]
    %789 = vset.pattern.permute.xlu0 0
    %790 = vperm.xlu0 %789, %v772
    %v791 = vpop.permute.xlu0 %790
    %794 = vset.pattern.permute.xlu0 0
    %795 = vperm.xlu0 %794, %v773
    %v796 = vpop.permute.xlu0 %795
    %799 = vset.pattern.permute.xlu0 0
    %800 = vperm.xlu0 %799, %v774
    %v801 = vpop.permute.xlu0 %800
    %804 = vset.pattern.permute.xlu0 0
    %805 = vperm.xlu0 %804, %v775
    %v806 = vpop.permute.xlu0 %805
    %809 = vset.pattern.permute.xlu0 0
    %810 = vperm.xlu0 %809, %v776
    %v811 = vpop.permute.xlu0 %810
    %814 = vset.pattern.permute.xlu0 0
    %815 = vperm.xlu0 %814, %v777
    %v816 = vpop.permute.xlu0 %815
    %819 = vset.pattern.permute.xlu0 0
    %820 = vperm.xlu0 %819, %v778
    %v821 = vpop.permute.xlu0 %820
    %824 = vset.pattern.permute.xlu0 0
    %825 = vperm.xlu0 %824, %v779
    %v826 = vpop.permute.xlu0 %825
    %829 = vset.pattern.permute.xlu0 0
    %830 = vperm.xlu0 %829, %v780
    %v831 = vpop.permute.xlu0 %830
    %834 = vset.pattern.permute.xlu0 0
    %835 = vperm.xlu0 %834, %v781
    %v836 = vpop.permute.xlu0 %835
    %839 = vset.pattern.permute.xlu0 0
    %840 = vperm.xlu0 %839, %v782
    %v841 = vpop.permute.xlu0 %840
    %844 = vset.pattern.permute.xlu0 0
    %845 = vperm.xlu0 %844, %v783
    %v846 = vpop.permute.xlu0 %845
    %849 = vset.pattern.permute.xlu0 0
    %850 = vperm.xlu0 %849, %v784
    %v851 = vpop.permute.xlu0 %850
    %854 = vset.pattern.permute.xlu0 0
    %855 = vperm.xlu0 %854, %v785
    %v856 = vpop.permute.xlu0 %855
    %859 = vset.pattern.permute.xlu0 0
    %860 = vperm.xlu0 %859, %v786
    %v861 = vpop.permute.xlu0 %860
    %864 = vset.pattern.permute.xlu0 0
    %865 = vperm.xlu0 %864, %v787
    %v866 = vpop.permute.xlu0 %865
    %v868 = vmul.f32 %v756, %v791
    %v869 = vmul.f32 %v757, %v796
    %v870 = vmul.f32 %v758, %v801
    %v871 = vmul.f32 %v759, %v806
    %v872 = vmul.f32 %v760, %v811
    %v873 = vmul.f32 %v761, %v816
    %v874 = vmul.f32 %v762, %v821
    %v875 = vmul.f32 %v763, %v826
    %v876 = vmul.f32 %v764, %v831
    %v877 = vmul.f32 %v765, %v836
    %v878 = vmul.f32 %v766, %v841
    %v879 = vmul.f32 %v767, %v846
    %v880 = vmul.f32 %v768, %v851
    %v881 = vmul.f32 %v769, %v856
    %v882 = vmul.f32 %v770, %v861
    %v883 = vmul.f32 %v771, %v866
    %vm884 = vcmask 64512
    %v885 = vsel %vm884, %v868, 0.0
    %v886 = vsel %vm884, %v869, 0.0
    %v887 = vadd.f32 %v885, %v886
    %v888 = vsel %vm884, %v870, 0.0
    %v889 = vadd.f32 %v887, %v888
    %v890 = vsel %vm884, %v871, 0.0
    %v891 = vadd.f32 %v889, %v890
    %v892 = vsel %vm884, %v872, 0.0
    %v893 = vadd.f32 %v891, %v892
    %v894 = vsel %vm884, %v873, 0.0
    %v895 = vadd.f32 %v893, %v894
    %v896 = vsel %vm884, %v874, 0.0
    %v897 = vadd.f32 %v895, %v896
    %v898 = vsel %vm884, %v875, 0.0
    %v899 = vadd.f32 %v897, %v898
    %v900 = vsel %vm884, %v876, 0.0
    %v901 = vadd.f32 %v899, %v900
    %v902 = vsel %vm884, %v877, 0.0
    %v903 = vadd.f32 %v901, %v902
    %v904 = vsel %vm884, %v878, 0.0
    %v905 = vadd.f32 %v903, %v904
    %v906 = vsel %vm884, %v879, 0.0
    %v907 = vadd.f32 %v905, %v906
    %v908 = vsel %vm884, %v880, 0.0
    %v909 = vadd.f32 %v907, %v908
    %v910 = vsel %vm884, %v881, 0.0
    %v911 = vadd.f32 %v909, %v910
    %v912 = vsel %vm884, %v882, 0.0
    %v913 = vadd.f32 %v911, %v912
    %v914 = vsel %vm884, %v883, 0.0
    %v915 = vadd.f32 %v913, %v914
    %v916 = vrot.slane %v915, 4
    %v917 = vadd.f32 %v915, %v916
    %v918 = vrot.slane %v917, 2
    %v919 = vadd.f32 %v917, %v918
    %v920 = vrot.slane %v919, 1
    %v921 = vadd.f32 %v919, %v920
    %s922 = sld [smem:[#allocation2]]
    %v923 = vstv %s922
    %v924 = vadd.f32 %v921, %v923
    %v925 = vxor.u32 %v924, 2147483648
    %v926 = vmul.f32 %v925, 1.442695
    %v927 = vpow.pop %v926
    %v928 = vadd.f32 %v927, 1.0
    %v929 = vrcp.pop %v928
    %v930 = vmul.f32 %v928, %v929
    %v931 = vsub.f32 1.0, %v930
    %v932 = vmul.f32 %v929, %v931
    %v933 = vadd.f32 %v929, %v932
    %vm934 = vweird.f32 %v928
    %vm935 = vweird.f32 %v929
    %vm936 = vmor %vm934, %vm935
    %v937 = vsel %vm936, %v929, %v933
    %v938 = vand.u32 2147483647, %v928
    %vm939 = vcmp.eq.f32.partialorder %v938, 8.507059e+37
    %v940 = vand.u32 %v928, 2147483648
    %v941 = vor.u32 1.1754944e-38, %v940
    %v942 = vsel %vm939, %v941, %v937
    %v943 = vmul.f32 1.0, %v942
    %vm944 = vcmask 57344
    %945 = vst.msk [vmem:[#allocation3] sm:$0x1] %vm944, %v943
    // Predicated region
    $region30: #{tpu_custom_call.1} parent=1 // pred_check
      _
    $region31: #{tpu_custom_call.1} parent=1 // pred_check_branch
      %947 = sbr.rel (0) target = $region33
    $region32: #{tpu_custom_call.1} parent=1 // pred_region
      %949 = vsyncadd [#allocation4], 0
      %s951 = sshll.u32 [#allocation3], 4
      %s952 = int_to_ptr.vmem [resolvable:$true] %s951
      %s953 = sshll.u32 %s7, 4
      %s954 = int_to_ptr.hbm [resolvable:$true] %s953
      %956 = dma.vmem_to_hbm [thread:$0]  %s952, 16, %s954, [#allocation4]
    $region33: #{tpu_custom_call.1} parent=1 // pred_fallthru
      _
    // Predicated region
    $region34: #{tpu_custom_call.1} parent=1 // pred_check
      _
    $region35: #{tpu_custom_call.1} parent=1 // pred_check_branch
      %958 = sbr.rel (0) target = $region37
    $region36: #{tpu_custom_call.1} parent=1 // pred_region
      %960 = dma.done [#allocation4], 16
    $region37: #{tpu_custom_call.1} parent=1 // pred_fallthru
      _
    %961 = vsyncpa [#allocation4], 1

</llo_original>
